<compile_context>
chip_gen: v7x
topology: tpu7x:2x2x1
jax: 0.10.0
libtpu: 0.0.40
codegen_flags: <defaults>
</compile_context>

<pallas_src>
import functools

import jax
import jax.numpy as jnp
from jax.experimental import pallas as pl
from jax.experimental.pallas import tpu as pltpu


def _round_up(x, m):
    return ((x + m - 1) // m) * m


def _cdiv(a, b):
    return -(-a // b)


def _vmem_budget_bytes():
    """Generation-aware scoped-VMEM budget for the kernel's tiles."""
    try:
        phys = int(pltpu.get_tpu_info().vmem_capacity_bytes)
    except Exception:
        phys = 64 << 20  # conservative: v7x has 64 MiB per TensorCore
    # ~60% of physical, never more than 64 MiB (leaves room for compiler scratch).
    return min(int(phys * 0.6), 64 << 20)


# --------------------------------------------------------------------------- #
# Kernel
# --------------------------------------------------------------------------- #
def classifier_kernel(x_ref, w1_ref, b1_ref, w2_ref, b2_ref, out_ref, acc_ref,
                      *, compute_dtype):
    """One (batch-tile, vocab-tile) grid step.

    Grid = (batch_tiles, vocab_tiles); vocab is the reduction axis (last,
    'arbitrary').  acc_ref is an f32 VMEM accumulator holding the hidden-layer
    pre-activation for the current batch tile.
    """
    k = pl.program_id(1)

    @pl.when(k == 0)
    def _init():
        # Fold the hidden bias into the accumulator init (broadcast materialized
        # once per batch tile, not once per reduction step).
        acc_ref[...] = jnp.broadcast_to(
            b1_ref[...].astype(jnp.float32), acc_ref.shape)

    a = x_ref[...]
    if a.dtype != compute_dtype:
        a = a.astype(compute_dtype)  # VPU cast, overlapped with DMA/MXU
    # Hidden-layer (partial) matmul on the MXU, f32 accumulation.
    acc_ref[...] += jnp.dot(a, w1_ref[...], preferred_element_type=jnp.float32)

    @pl.when(k == pl.num_programs(1) - 1)
    def _finalize():
        h = jnp.maximum(acc_ref[...], 0.0)  # ReLU in f32
        logits = jnp.dot(
            h, w2_ref[...], preferred_element_type=jnp.float32) + b2_ref[...]
        # Numerically stable log_softmax over the lane-dense (padded-to-128) label
        # axis; padded lanes carry -inf from b2 so exp(...) == 0 exactly.
        m = jnp.max(logits, axis=-1, keepdims=True)
        shifted = logits - m
        lse = jnp.log(jnp.sum(jnp.exp(shifted), axis=-1, keepdims=True))
        out_ref[...] = (shifted - lse).astype(out_ref.dtype)


# --------------------------------------------------------------------------- #
# One-time parameter preparation (outside the hot path)
# --------------------------------------------------------------------------- #
def prepare_classifier_params(w1, b1, w2, b2, *, weight_dtype=jnp.float32):
    """Pad + cast the weights once.

    w1: (V, H)  == hidden.weight.T     b1: (H,) or (1, H)
    w2: (H, L)  == output.weight.T     b2: (L,) or (1, L)
    """
    w1 = jnp.asarray(w1, jnp.float32)
    w2 = jnp.asarray(w2, jnp.float32)
    b1 = jnp.asarray(b1, jnp.float32).reshape(1, -1)
    b2 = jnp.asarray(b2, jnp.float32).reshape(1, -1)

    V, H = w1.shape
    Hw, L = w2.shape
    assert H == Hw and b1.shape[1] == H and b2.shape[1] == L

    Vp = _round_up(V, 128)
    Hp = _round_up(H, 128)
    Lp = _round_up(L, 128)

    w1p = jnp.pad(w1, ((0, Vp - V), (0, Hp - H))).astype(weight_dtype)
    b1p = jnp.pad(b1, ((0, 0), (0, Hp - H)))
    w2p = jnp.pad(w2, ((0, Hp - H), (0, Lp - L)))
    # True -inf on padded label lanes: exp(shifted) == 0 exactly, regardless of
    # how negative the real logits are.
    b2p = jnp.pad(b2, ((0, 0), (0, Lp - L)), constant_values=float("-inf"))

    return {
        "w1": w1p, "b1": b1p, "w2": w2p, "b2": b2p,
        "vocab_size": V, "hidden_size": H, "num_labels": L,
    }


# --------------------------------------------------------------------------- #
# Tile selection
# --------------------------------------------------------------------------- #
def _choose_tiles(B, Vp, Hp, Lp, x_item, w_item, batch_tile, vocab_tile, budget):
    const_bytes = 2 * (Hp * Lp + Hp + Lp) * 4  # resident w2/b1/b2 (double-buffered)

    def need(tm, tk):
        return (2 * tm * tk * x_item        # x tiles (double-buffered)
                + 2 * tk * Hp * w_item      # w1 tiles (double-buffered)
                + const_bytes
                + 2 * tm * Lp * 4           # output tiles (double-buffered)
                + tm * Hp * 4)              # f32 accumulator scratch

    tm = min(_round_up(B, 8), max(8, _round_up(batch_tile, 8)))

    def pick_tk(tm_):
        # Prefer collapsing the reduction (tk == Vp): w1 is then DMA'd once total,
        # independent of the number of batch tiles.
        if need(tm_, Vp) <= budget:
            return Vp
        cap = min(Vp, max(128, _round_up(vocab_tile, 128)))
        t = cap
        while t >= 128:
            if Vp % t == 0 and need(tm_, t) <= budget:
                return t
            t -= 128
        return None

    tk = pick_tk(tm)
    while tk is None and tm > 8:
        tm = max(8, _round_up(tm // 2, 8))
        tk = pick_tk(tm)
    if tk is None:
        tm, tk = 8, 128  # smallest legal tiles; vmem_limit below covers the footprint

    # Megacore (v7x has 2 TensorCores): when the reduction is collapsed, splitting
    # the batch into >=2 'parallel' tiles costs no extra w1 traffic.
    if tk == Vp and B >= 16 and _cdiv(B, tm) == 1:
        tm = _round_up(_cdiv(B, 2), 8)

    return tm, tk, need(tm, tk)


# --------------------------------------------------------------------------- #
# Forward wrapper
# --------------------------------------------------------------------------- #
def classifier_forward(x, params, *, batch_tile=512, vocab_tile=1024):
    """log_softmax(relu(x @ w1 + b1) @ w2 + b2, axis=1) -> (B, num_labels) f32."""
    x = jnp.asarray(x)
    if x.dtype not in (jnp.float32, jnp.bfloat16):
        x = x.astype(jnp.float32)

    w1p, b1p, w2p, b2p = params["w1"], params["b1"], params["w2"], params["b2"]
    V, L = params["vocab_size"], params["num_labels"]
    Vp, Hp = w1p.shape
    Lp = w2p.shape[1]
    B, Vx = x.shape
    assert Vx == V, f"x vocab dim {Vx} != prepared vocab {V}"

    compute_dtype = w1p.dtype
    x_item = jnp.dtype(x.dtype).itemsize
    w_item = jnp.dtype(compute_dtype).itemsize

    budget = _vmem_budget_bytes()
    tm, tk, need = _choose_tiles(B, Vp, Hp, Lp, x_item, w_item,
                                 batch_tile, vocab_tile, budget)

    Bp = _round_up(B, tm)
    grid = (Bp // tm, Vp // tk)

    # Pad x only when its shape actually requires it (tk always divides Vp).
    if (Bp, Vp) != (B, V):
        x = jnp.pad(x, ((0, Bp - B), (0, Vp - V)))

    # Never below the real tile footprint, never above the per-generation cap.
    vmem_limit = int(max(need + (1 << 20), 16 << 20))
    vmem_limit = min(vmem_limit, budget + (4 << 20))
    vmem_limit = max(vmem_limit, need + (1 << 20))

    kernel = functools.partial(classifier_kernel, compute_dtype=compute_dtype)

    out_p = pl.pallas_call(
        kernel,
        out_shape=jax.ShapeDtypeStruct((Bp, Lp), jnp.float32),
        grid_spec=pltpu.PrefetchScalarGridSpec(
            num_scalar_prefetch=0,
            grid=grid,
            in_specs=[
                pl.BlockSpec((tm, tk), lambda i, k: (i, k)),   # x tile
                pl.BlockSpec((tk, Hp), lambda i, k: (k, 0)),   # w1 tile
                pl.BlockSpec((1, Hp), lambda i, k: (0, 0)),    # b1 (resident)
                pl.BlockSpec((Hp, Lp), lambda i, k: (0, 0)),   # w2 (resident)
                pl.BlockSpec((1, Lp), lambda i, k: (0, 0)),    # b2 (resident)
            ],
            out_specs=pl.BlockSpec((tm, Lp), lambda i, k: (i, 0)),
            scratch_shapes=[pltpu.VMEM((tm, Hp), jnp.float32)],
        ),
        compiler_params=pltpu.CompilerParams(
            dimension_semantics=("parallel", "arbitrary"),
            vmem_limit_bytes=vmem_limit,
        ),
    )(x, w1p, b1p, w2p, b2p)

    return out_p[:B, :L]


# --------------------------------------------------------------------------- #
# Self-test
# --------------------------------------------------------------------------- #
def _torch_like_linear_params(key, fan_in, fan_out):
    kw, kb = jax.random.split(key)
    bound = 1.0 / jnp.sqrt(fan_in)
    w = jax.random.uniform(kw, (fan_in, fan_out), jnp.float32, -bound, bound)
    b = jax.random.uniform(kb, (fan_out,), jnp.float32, -bound, bound)
    return w, b


def _reference(x, w1, b1, w2, b2):
    h = jnp.maximum(x @ w1 + b1, 0.0)
    return jax.nn.log_softmax(h @ w2 + b2, axis=1)


if __name__ == "__main__":
    key = jax.random.PRNGKey(0)

    # ---- Main toy shape: matches the module (hidden_size = 128) ----
    batch, vocab_size, hidden_size, num_labels = 8, 256, 128, 4
    kx, k1, k2 = jax.random.split(key, 3)
    x = jax.random.normal(kx, (batch, vocab_size), jnp.float32)
    w1, b1 = _torch_like_linear_params(k1, vocab_size, hidden_size)
    w2, b2 = _torch_like_linear_params(k2, hidden_size, num_labels)
    ref = _reference(x, w1, b1, w2, b2)

    # f32 path: exact match vs. reference.
    params_f32 = prepare_classifier_params(w1, b1, w2, b2)
    out = classifier_forward(x, params_f32)
    jax.block_until_ready(out)
    assert out.shape == (batch, num_labels)
    assert jnp.allclose(out, ref, atol=1e-5, rtol=1e-5), "f32 mismatch vs reference"

    # bf16 weight/x path (bandwidth optimization); loose tolerance.
    params_bf16 = prepare_classifier_params(w1, b1, w2, b2,
                                            weight_dtype=jnp.bfloat16)
    out_bf16 = classifier_forward(x.astype(jnp.bfloat16), params_bf16)
    jax.block_until_ready(out_bf16)
    assert out_bf16.shape == (batch, num_labels)
    assert bool(jnp.all(jnp.isfinite(out_bf16)))
    assert jnp.allclose(out_bf16, ref, atol=1e-1, rtol=1e-1), "bf16 mismatch vs reference"

    # Ragged shapes: exercises batch / vocab / hidden / label padding paths.
    B2, V2, H2, L2 = 10, 200, 96, 5
    kx2, k3, k4 = jax.random.split(jax.random.PRNGKey(1), 3)
    x2 = jax.random.normal(kx2, (B2, V2), jnp.float32)
    w1r, b1r = _torch_like_linear_params(k3, V2, H2)
    w2r, b2r = _torch_like_linear_params(k4, H2, L2)
    ref2 = _reference(x2, w1r, b1r, w2r, b2r)
    out2 = classifier_forward(x2, prepare_classifier_params(w1r, b1r, w2r, b2r))
    jax.block_until_ready(out2)
    assert out2.shape == (B2, L2)
    assert jnp.allclose(out2, ref2, atol=1e-5, rtol=1e-5), "ragged-shape mismatch"

    print("KERNEL_OK")
</pallas_src>

<mosaic_0001>
module attributes {stable_mosaic.version = 11 : i64} {
  func.func @classifier_kernel(%arg0: i32, %arg1: i32, %arg2: memref<8x256xf32, #tpu.memory_space<vmem>>, %arg3: memref<256x128xf32, #tpu.memory_space<vmem>>, %arg4: memref<1x128xf32, #tpu.memory_space<vmem>>, %arg5: memref<128x128xf32, #tpu.memory_space<vmem>>, %arg6: memref<1x128xf32, #tpu.memory_space<vmem>>, %arg7: memref<8x128xf32, #tpu.memory_space<vmem>>, %arg8: memref<8x128xf32, #tpu.memory_space<vmem>>) attributes {dimension_semantics = [#tpu.dimension_semantics<parallel>, #tpu.dimension_semantics<arbitrary>], iteration_bounds = array<i64: 1, 1>, scalar_prefetch = 0 : i64, scratch_operands = 1 : i64, tpu.core_type = #tpu.core_type<tc>, window_params = [{transform_indices = @transform_0, window_bounds = array<i64: 8, 256>}, {transform_indices = @transform_1, window_bounds = array<i64: 256, 128>}, {pipeline_mode = #tpu.pipeline_mode<synchronous>, transform_indices = @transform_2, window_bounds = array<i64: 1, 128>}, {pipeline_mode = #tpu.pipeline_mode<synchronous>, transform_indices = @transform_3, window_bounds = array<i64: 128, 128>}, {pipeline_mode = #tpu.pipeline_mode<synchronous>, transform_indices = @transform_4, window_bounds = array<i64: 1, 128>}, {transform_indices = @transform_5, window_bounds = array<i64: 8, 128>}]} {
    %c0_i32 = arith.constant 0 : i32
    %0 = arith.cmpi eq, %arg1, %c0_i32 : i32
    %1 = arith.extui %0 : i1 to i32
    %c0_i32_0 = arith.constant 0 : i32
    %2 = arith.cmpi ne, %1, %c0_i32_0 : i32
    scf.if %2 {
      %c0_10 = arith.constant 0 : index
      %c0_11 = arith.constant 0 : index
      %12 = vector.load %arg4[%c0_10, %c0_11] : memref<1x128xf32, #tpu.memory_space<vmem>>, vector<1x128xf32>
      %13 = vector.shape_cast %12 : vector<1x128xf32> to vector<1x128xf32>
      %14 = vector.broadcast %13 : vector<1x128xf32> to vector<8x128xf32>
      %c0_12 = arith.constant 0 : index
      %c0_13 = arith.constant 0 : index
      %15 = vector.load %arg8[%c0_12, %c0_13] : memref<8x128xf32, #tpu.memory_space<vmem>>, vector<8x128xf32>
      tpu.vector_store %arg8[%c0_12, %c0_13], %14 {strides = array<i32>} : memref<8x128xf32, #tpu.memory_space<vmem>>, vector<8x128xf32>,
    } else {
    }
    %c0 = arith.constant 0 : index
    %c0_1 = arith.constant 0 : index
    %3 = vector.load %arg2[%c0, %c0_1] : memref<8x256xf32, #tpu.memory_space<vmem>>, vector<8x256xf32>
    %c0_2 = arith.constant 0 : index
    %c0_3 = arith.constant 0 : index
    %4 = vector.load %arg8[%c0_2, %c0_3] : memref<8x128xf32, #tpu.memory_space<vmem>>, vector<8x128xf32>
    %c0_4 = arith.constant 0 : index
    %c0_5 = arith.constant 0 : index
    %5 = vector.load %arg3[%c0_4, %c0_5] : memref<256x128xf32, #tpu.memory_space<vmem>>, vector<256x128xf32>
    %cst = arith.constant dense<0.000000e+00> : vector<8x128xf32>
    %6 = tpu.matmul %3, %5, %cst {dimension_numbers = #tpu.dot_dimension_numbers<[1], [0], [0], [1], [0, 0, 1, 1], [], []>} : vector<8x256xf32>, vector<256x128xf32>, vector<8x128xf32> -> vector<8x128xf32>
    %7 = arith.addf %4, %6 : vector<8x128xf32>
    %c0_6 = arith.constant 0 : index
    %c0_7 = arith.constant 0 : index
    %8 = vector.load %arg8[%c0_6, %c0_7] : memref<8x128xf32, #tpu.memory_space<vmem>>, vector<8x128xf32>
    tpu.vector_store %arg8[%c0_6, %c0_7], %7 {strides = array<i32>} : memref<8x128xf32, #tpu.memory_space<vmem>>, vector<8x128xf32>,
    %c0_i32_8 = arith.constant 0 : i32
    %9 = arith.cmpi eq, %arg1, %c0_i32_8 : i32
    %10 = arith.extui %9 : i1 to i32
    %c0_i32_9 = arith.constant 0 : i32
    %11 = arith.cmpi ne, %10, %c0_i32_9 : i32
    scf.if %11 {
      %c0_10 = arith.constant 0 : index
      %c0_11 = arith.constant 0 : index
      %12 = vector.load %arg8[%c0_10, %c0_11] : memref<8x128xf32, #tpu.memory_space<vmem>>, vector<8x128xf32>
      %cst_12 = arith.constant 0.000000e+00 : f32
      %13 = vector.broadcast %cst_12 : f32 to vector<8x128xf32>
      %14 = arith.maximumf %12, %13 : vector<8x128xf32>
      %c0_13 = arith.constant 0 : index
      %c0_14 = arith.constant 0 : index
      %15 = vector.load %arg5[%c0_13, %c0_14] : memref<128x128xf32, #tpu.memory_space<vmem>>, vector<128x128xf32>
      %cst_15 = arith.constant dense<0.000000e+00> : vector<8x128xf32>
      %16 = tpu.matmul %14, %15, %cst_15 {dimension_numbers = #tpu.dot_dimension_numbers<[1], [0], [0], [1], [0, 0, 1, 1], [], []>} : vector<8x128xf32>, vector<128x128xf32>, vector<8x128xf32> -> vector<8x128xf32>
      %c0_16 = arith.constant 0 : index
      %c0_17 = arith.constant 0 : index
      %17 = vector.load %arg6[%c0_16, %c0_17] : memref<1x128xf32, #tpu.memory_space<vmem>>, vector<1x128xf32>
      %18 = vector.broadcast %17 : vector<1x128xf32> to vector<8x128xf32>
      %19 = arith.addf %16, %18 : vector<8x128xf32>
      %cst_18 = arith.constant dense<0xFF800000> : vector<8xf32>
      %20 = vector.multi_reduction <maximumf>, %19, %cst_18 [1] : vector<8x128xf32> to vector<8xf32>
      %21 = vector.shape_cast %20 : vector<8xf32> to vector<8x1xf32>
      %22 = vector.broadcast %21 : vector<8x1xf32> to vector<8x128xf32>
      %23 = arith.subf %19, %22 : vector<8x128xf32>
      %24 = math.exp %23 : vector<8x128xf32>
      %cst_19 = arith.constant dense<0.000000e+00> : vector<8xf32>
      %25 = vector.multi_reduction <add>, %24, %cst_19 [1] : vector<8x128xf32> to vector<8xf32>
      %26 = vector.shape_cast %25 : vector<8xf32> to vector<8x1xf32>
      %27 = math.log %26 : vector<8x1xf32>
      %28 = vector.broadcast %27 : vector<8x1xf32> to vector<8x128xf32>
      %29 = arith.subf %23, %28 : vector<8x128xf32>
      %c0_20 = arith.constant 0 : index
      %c0_21 = arith.constant 0 : index
      %30 = vector.load %arg7[%c0_20, %c0_21] : memref<8x128xf32, #tpu.memory_space<vmem>>, vector<8x128xf32>
      tpu.vector_store %arg7[%c0_20, %c0_21], %29 {strides = array<i32>} : memref<8x128xf32, #tpu.memory_space<vmem>>, vector<8x128xf32>,
    } else {
    }
    return
  }
  func.func @transform_0(%arg0: i32, %arg1: i32) -> (i32, i32) {
    %c0_i32 = arith.constant 0 : i32
    return %arg0, %arg1 : i32, i32
  }
  func.func @transform_1(%arg0: i32, %arg1: i32) -> (i32, i32) {
    %c0_i32 = arith.constant 0 : i32
    %c0_i32_0 = arith.constant 0 : i32
    return %arg1, %c0_i32 : i32, i32
  }
  func.func @transform_2(%arg0: i32, %arg1: i32) -> (i32, i32) {
    %c0_i32 = arith.constant 0 : i32
    %c0_i32_0 = arith.constant 0 : i32
    %c0_i32_1 = arith.constant 0 : i32
    return %c0_i32, %c0_i32_0 : i32, i32
  }
  func.func @transform_3(%arg0: i32, %arg1: i32) -> (i32, i32) {
    %c0_i32 = arith.constant 0 : i32
    %c0_i32_0 = arith.constant 0 : i32
    %c0_i32_1 = arith.constant 0 : i32
    return %c0_i32, %c0_i32_0 : i32, i32
  }
  func.func @transform_4(%arg0: i32, %arg1: i32) -> (i32, i32) {
    %c0_i32 = arith.constant 0 : i32
    %c0_i32_0 = arith.constant 0 : i32
    %c0_i32_1 = arith.constant 0 : i32
    return %c0_i32, %c0_i32_0 : i32, i32
  }
  func.func @transform_5(%arg0: i32, %arg1: i32) -> (i32, i32) {
    %c0_i32 = arith.constant 0 : i32
    %c0_i32_0 = arith.constant 0 : i32
    return %arg0, %c0_i32 : i32, i32
  }
}

</mosaic_0001>

<llo_original>
// kernel: tpu_custom_call.1
$region0: #{tpu_custom_call.1}
  #allocation0 [shape = 'u32[]', space=smem, size = 0x4, offset = 0x4, fixed_abs, tag = 'smem constant byte address 0x4 - core index']
  #allocation1 [shape = 'u32[144,128]{1,0:T(1,128)}', space=vmem, size = 0x12000, scoped, tag = 'internal scratch']
  #allocation2 [shape = 'f32[8,128]{1,0:T(8,128)}', space=vmem, size = 0x1000, scoped, tag = 'scratch operand']
  %s0 = inlined_call_operand.hbm [shape: f32[8,256], index: 0, kind: input, shape index: {}]
  %s1 = inlined_call_operand.hbm [shape: f32[256,128], index: 1, kind: input, shape index: {}]
  %s2 = inlined_call_operand.vmem [shape: f32[1,128], index: 2, kind: input, shape index: {}]
  %s3 = inlined_call_operand.hbm [shape: f32[128,128], index: 3, kind: input, shape index: {}]
  %s4 = inlined_call_operand.vmem [shape: f32[1,128], index: 4, kind: input, shape index: {}]
  %s5 = inlined_call_operand.hbm [shape: f32[8,128], index: 5, kind: output, shape index: {}]
  %s6 = sld [smem:[#allocation0]]
  $region50: #{tpu_custom_call.1} parent=0
    _
  %s8 = ssub.s32 1, %s6
  %s9 = scalar_select 0, %s8, %s6
  $region1: #{tpu_custom_call.1} parent=0
    #allocation3 [shape = 'u8[8192]{0}', space=vmem, size = 0x2000, scoped, tag = 'input window, operand 0, single buffered']
    #allocation4 [shape = 's32[1]{0}', space=sflag, size = 0x4, scoped, tag = 'scoped memory for tpu_custom_call.1']
    #allocation5 [shape = 's32[1]{0}', space=sflag, size = 0x4, scoped, tag = 'scoped memory for tpu_custom_call.1']
    #allocation6 [shape = 'u8[131072]{0}', space=vmem, size = 0x20000, scoped, tag = 'input window, operand 1, single buffered']
    #allocation7 [shape = 's32[1]{0}', space=sflag, size = 0x4, scoped, tag = 'scoped memory for tpu_custom_call.1']
    #allocation8 [shape = 'u8[65536]{0}', space=vmem, size = 0x10000, scoped, tag = 'input window, operand 3, single buffered']
    #allocation9 [shape = 'u8[4096]{0}', space=vmem, size = 0x1000, scoped, tag = 'output window, operand 0, single buffered']
    %10 = vsyncpa [#allocation4], 0
    %11 = vsyncpa [#allocation7], 0
    %12 = vsyncpa [#allocation5], 0
    // Predicated region
    $region2: #{tpu_custom_call.1} parent=1 // pred_check
      _
    $region3: #{tpu_custom_call.1} parent=1 // pred_check_branch
      %14 = sbr.rel (0) target = $region5
    $region4: #{tpu_custom_call.1} parent=1 // pred_region
      %s16 = ssub.s32 256, 256
      %17 = vsyncadd [#allocation4], %s16
      %s19 = sshll.u32 [#allocation3], 4
      %s20 = int_to_ptr.vmem [resolvable:$true] %s19
      %22 = dma.hbm_to_vmem [thread:$0]  %s0, 256, %s20, [#allocation4]
    $region5: #{tpu_custom_call.1} parent=1 // pred_fallthru
      _
    // Predicated region
    $region6: #{tpu_custom_call.1} parent=1 // pred_check
      _
    $region7: #{tpu_custom_call.1} parent=1 // pred_check_branch
      %24 = sbr.rel (0) target = $region9
    $region8: #{tpu_custom_call.1} parent=1 // pred_region
      %s26 = ssub.s32 4096, 4096
      %27 = vsyncadd [#allocation7], %s26
      %s28 = sshll.u32 [#allocation6], 4
      %s29 = int_to_ptr.vmem [resolvable:$true] %s28
      %34 = dma.hbm_to_vmem [thread:$0]  %s1, 4096, %s29, [#allocation7], 128, 128, 8
    $region9: #{tpu_custom_call.1} parent=1 // pred_fallthru
      _
    // Predicated region
    $region10: #{tpu_custom_call.1} parent=1 // pred_check
      _
    $region11: #{tpu_custom_call.1} parent=1 // pred_check_branch
      %36 = sbr.rel (0) target = $region13
    $region12: #{tpu_custom_call.1} parent=1 // pred_region
      _
    $region13: #{tpu_custom_call.1} parent=1 // pred_fallthru
      _
    // Predicated region
    $region14: #{tpu_custom_call.1} parent=1 // pred_check
      _
    $region15: #{tpu_custom_call.1} parent=1 // pred_check_branch
      %38 = sbr.rel (0) target = $region17
    $region16: #{tpu_custom_call.1} parent=1 // pred_region
      %s40 = ssub.s32 2048, 2048
      %41 = vsyncadd [#allocation7], %s40
      %s42 = sshll.u32 [#allocation8], 4
      %s43 = int_to_ptr.vmem [resolvable:$true] %s42
      %48 = dma.hbm_to_vmem [thread:$0]  %s3, 2048, %s43, [#allocation7], 128, 128, 8
    $region17: #{tpu_custom_call.1} parent=1 // pred_fallthru
      _
    // Predicated region
    $region18: #{tpu_custom_call.1} parent=1 // pred_check
      _
    $region19: #{tpu_custom_call.1} parent=1 // pred_check_branch
      %50 = sbr.rel (0) target = $region21
    $region20: #{tpu_custom_call.1} parent=1 // pred_region
      _
    $region21: #{tpu_custom_call.1} parent=1 // pred_fallthru
      _
    // Predicated region
    $region22: #{tpu_custom_call.1} parent=1 // pred_check
      _
    $region23: #{tpu_custom_call.1} parent=1 // pred_check_branch
      %52 = sbr.rel (0) target = $region25
    $region24: #{tpu_custom_call.1} parent=1 // pred_region
      %53 = dma.done [#allocation4], 256
    $region25: #{tpu_custom_call.1} parent=1 // pred_fallthru
      _
    // Predicated region
    $region26: #{tpu_custom_call.1} parent=1 // pred_check
      _
    $region27: #{tpu_custom_call.1} parent=1 // pred_check_branch
      %55 = sbr.rel (0) target = $region29
    $region28: #{tpu_custom_call.1} parent=1 // pred_region
      %56 = dma.done [#allocation7], 4096
    $region29: #{tpu_custom_call.1} parent=1 // pred_fallthru
      _
    // Predicated region
    $region30: #{tpu_custom_call.1} parent=1 // pred_check
      _
    $region31: #{tpu_custom_call.1} parent=1 // pred_check_branch
      %58 = sbr.rel (0) target = $region33
    $region32: #{tpu_custom_call.1} parent=1 // pred_region
      %59 = dma.done [#allocation7], 2048
    $region33: #{tpu_custom_call.1} parent=1 // pred_fallthru
      _
    %p60 = scmp.eq.s32.totalorder 0, 0
    // Predicated region
    $region34: #{tpu_custom_call.1} parent=1 // pred_check
      %p61 = pneg %p60
    $region35: #{tpu_custom_call.1} parent=1 // pred_check_branch
      %63 = sbr.rel (%p61) target = $region37
    $region36: #{tpu_custom_call.1} parent=1 // pred_region
      %v64 = vld [vmem:[%s2] sm:$0x1]
      %v66 = vlaneseq
      %v67 = vshrl.u32 %v66, 7
      %v68 = vsub.s32 0, %v67
      %v69 = vrot.slane %v64, %v68
      %71 = vst [vmem:[#allocation2] sm:$0xff] %v69
    $region37: #{tpu_custom_call.1} parent=1 // pred_fallthru
      _
    %v72 = vld [vmem:[#allocation3] sm:$0xff]
    %v73 = vld [vmem:[#allocation3 + $0x8] sm:$0xff]
    %v74 = vld [vmem:[#allocation2] sm:$0xff]
    %v75 = vld [vmem:[#allocation6] sm:$0xff]
    %v76 = vld [vmem:[#allocation6 + $0x8] sm:$0xff]
    %v77 = vld [vmem:[#allocation6 + $0x10] sm:$0xff]
    %v78 = vld [vmem:[#allocation6 + $0x18] sm:$0xff]
    %v79 = vld [vmem:[#allocation6 + $0x20] sm:$0xff]
    %v80 = vld [vmem:[#allocation6 + $0x28] sm:$0xff]
    %v81 = vld [vmem:[#allocation6 + $0x30] sm:$0xff]
    %v82 = vld [vmem:[#allocation6 + $0x38] sm:$0xff]
    %v83 = vld [vmem:[#allocation6 + $0x40] sm:$0xff]
    %v84 = vld [vmem:[#allocation6 + $0x48] sm:$0xff]
    %v85 = vld [vmem:[#allocation6 + $0x50] sm:$0xff]
    %v86 = vld [vmem:[#allocation6 + $0x58] sm:$0xff]
    %v87 = vld [vmem:[#allocation6 + $0x60] sm:$0xff]
    %v88 = vld [vmem:[#allocation6 + $0x68] sm:$0xff]
    %v89 = vld [vmem:[#allocation6 + $0x70] sm:$0xff]
    %v90 = vld [vmem:[#allocation6 + $0x78] sm:$0xff]
    %v91 = vld [vmem:[#allocation6 + $0x80] sm:$0xff]
    %v92 = vld [vmem:[#allocation6 + $0x88] sm:$0xff]
    %v93 = vld [vmem:[#allocation6 + $0x90] sm:$0xff]
    %v94 = vld [vmem:[#allocation6 + $0x98] sm:$0xff]
    %v95 = vld [vmem:[#allocation6 + $0xa0] sm:$0xff]
    %v96 = vld [vmem:[#allocation6 + $0xa8] sm:$0xff]
    %v97 = vld [vmem:[#allocation6 + $0xb0] sm:$0xff]
    %v98 = vld [vmem:[#allocation6 + $0xb8] sm:$0xff]
    %v99 = vld [vmem:[#allocation6 + $0xc0] sm:$0xff]
    %v100 = vld [vmem:[#allocation6 + $0xc8] sm:$0xff]
    %v101 = vld [vmem:[#allocation6 + $0xd0] sm:$0xff]
    %v102 = vld [vmem:[#allocation6 + $0xd8] sm:$0xff]
    %v103 = vld [vmem:[#allocation6 + $0xe0] sm:$0xff]
    %v104 = vld [vmem:[#allocation6 + $0xe8] sm:$0xff]
    %v105 = vld [vmem:[#allocation6 + $0xf0] sm:$0xff]
    %v106 = vld [vmem:[#allocation6 + $0xf8] sm:$0xff]
    %107 = vmatprep.subr.mxu0 0.0
    %108 = vmatpush1.msra.mxu0 %v75
    %109 = vmatprep.subr.mxu0 0.0
    %110 = vmatpush1.msra.mxu0 %v76
    %111 = vmatprep.subr.mxu0 0.0
    %112 = vmatpush1.msra.mxu0 %v77
    %113 = vmatprep.subr.mxu0 0.0
    %114 = vmatpush1.msra.mxu0 %v78
    %115 = vmatprep.subr.mxu0 0.0
    %116 = vmatpush1.msra.mxu0 %v79
    %117 = vmatprep.subr.mxu0 0.0
    %118 = vmatpush1.msra.mxu0 %v80
    %119 = vmatprep.subr.mxu0 0.0
    %120 = vmatpush1.msra.mxu0 %v81
    %121 = vmatprep.subr.mxu0 0.0
    %122 = vmatpush1.msra.mxu0 %v82
    %123 = vmatprep.subr.mxu0 0.0
    %124 = vmatpush1.msra.mxu0 %v83
    %125 = vmatprep.subr.mxu0 0.0
    %126 = vmatpush1.msra.mxu0 %v84
    %127 = vmatprep.subr.mxu0 0.0
    %128 = vmatpush1.msra.mxu0 %v85
    %129 = vmatprep.subr.mxu0 0.0
    %130 = vmatpush1.msra.mxu0 %v86
    %131 = vmatprep.subr.mxu0 0.0
    %132 = vmatpush1.msra.mxu0 %v87
    %133 = vmatprep.subr.mxu0 0.0
    %134 = vmatpush1.msra.mxu0 %v88
    %135 = vmatprep.subr.mxu0 0.0
    %136 = vmatpush1.msra.mxu0 %v89
    %137 = vmatprep.subr.mxu0 0.0
    %138 = vmatpush1.msra.mxu0 %v90
    %139 = vmatprep.subr.mxu0 0.0
    %140 = vmatpush1.msra.mxu0 %v91
    %141 = vmatprep.subr.mxu0 0.0
    %142 = vmatpush1.msra.mxu0 %v92
    %143 = vmatprep.subr.mxu0 0.0
    %144 = vmatpush1.msra.mxu0 %v93
    %145 = vmatprep.subr.mxu0 0.0
    %146 = vmatpush1.msra.mxu0 %v94
    %147 = vmatprep.subr.mxu0 0.0
    %148 = vmatpush1.msra.mxu0 %v95
    %149 = vmatprep.subr.mxu0 0.0
    %150 = vmatpush1.msra.mxu0 %v96
    %151 = vmatprep.subr.mxu0 0.0
    %152 = vmatpush1.msra.mxu0 %v97
    %153 = vmatprep.subr.mxu0 0.0
    %154 = vmatpush1.msra.mxu0 %v98
    %155 = vmatprep.subr.mxu0 0.0
    %156 = vmatpush1.msra.mxu0 %v99
    %157 = vmatprep.subr.mxu0 0.0
    %158 = vmatpush1.msra.mxu0 %v100
    %159 = vmatprep.subr.mxu0 0.0
    %160 = vmatpush1.msra.mxu0 %v101
    %161 = vmatprep.subr.mxu0 0.0
    %162 = vmatpush1.msra.mxu0 %v102
    %163 = vmatprep.subr.mxu0 0.0
    %164 = vmatpush1.msra.mxu0 %v103
    %165 = vmatprep.subr.mxu0 0.0
    %166 = vmatpush1.msra.mxu0 %v104
    %167 = vmatprep.subr.mxu0 0.0
    %168 = vmatpush1.msra.mxu0 %v105
    %169 = vmatprep.subr.mxu0 0.0
    %170 = vmatpush1.msra.mxu0 %v106
    %171 = vmatprep.mubr.f32.mxu0 %v73
    %172 = vmatmul.mubr.f32.gmra.mrb[0].mxu0 %v72
    %v173 = vpop.f32.mrb[0].mxu0
    %v174 = vadd.f32 0.0, %v173
    %v175 = vpop.f32.mrb[0].mxu0
    %176 = vdwg.mxu0
    %v177 = vadd.f32 %v74, %v174
    %178 = vst [vmem:[#allocation2] sm:$0xff] %v177
    // Predicated region
    $region38: #{tpu_custom_call.1} parent=1 // pred_check
      %p179 = pneg %p60
    $region39: #{tpu_custom_call.1} parent=1 // pred_check_branch
      %181 = sbr.rel (%p179) target = $region41
    $region40: #{tpu_custom_call.1} parent=1 // pred_region
      %v182 = vld [vmem:[#allocation2] sm:$0xff]
      %v183 = vmax.f32 %v182, 0.0
      %v184 = vld [vmem:[#allocation8] sm:$0xff]
      %v185 = vld [vmem:[#allocation8 + $0x8] sm:$0xff]
      %v186 = vld [vmem:[#allocation8 + $0x10] sm:$0xff]
      %v187 = vld [vmem:[#allocation8 + $0x18] sm:$0xff]
      %v188 = vld [vmem:[#allocation8 + $0x20] sm:$0xff]
      %v189 = vld [vmem:[#allocation8 + $0x28] sm:$0xff]
      %v190 = vld [vmem:[#allocation8 + $0x30] sm:$0xff]
      %v191 = vld [vmem:[#allocation8 + $0x38] sm:$0xff]
      %v192 = vld [vmem:[#allocation8 + $0x40] sm:$0xff]
      %v193 = vld [vmem:[#allocation8 + $0x48] sm:$0xff]
      %v194 = vld [vmem:[#allocation8 + $0x50] sm:$0xff]
      %v195 = vld [vmem:[#allocation8 + $0x58] sm:$0xff]
      %v196 = vld [vmem:[#allocation8 + $0x60] sm:$0xff]
      %v197 = vld [vmem:[#allocation8 + $0x68] sm:$0xff]
      %v198 = vld [vmem:[#allocation8 + $0x70] sm:$0xff]
      %v199 = vld [vmem:[#allocation8 + $0x78] sm:$0xff]
      %v200 = vld [vmem:[%s4] sm:$0x1]
      %v202 = vlaneseq
      %v203 = vshrl.u32 %v202, 7
      %v204 = vsub.s32 0, %v203
      %v205 = vrot.slane %v200, %v204
      %207 = vmatprep.subr.mxu0 0.0
      %208 = vmatpush1.msra.mxu0 %v184
      %209 = vmatprep.subr.mxu0 0.0
      %210 = vmatpush1.msra.mxu0 %v185
      %211 = vmatprep.subr.mxu0 0.0
      %212 = vmatpush1.msra.mxu0 %v186
      %213 = vmatprep.subr.mxu0 0.0
      %214 = vmatpush1.msra.mxu0 %v187
      %215 = vmatprep.subr.mxu0 0.0
      %216 = vmatpush1.msra.mxu0 %v188
      %217 = vmatprep.subr.mxu0 0.0
      %218 = vmatpush1.msra.mxu0 %v189
      %219 = vmatprep.subr.mxu0 0.0
      %220 = vmatpush1.msra.mxu0 %v190
      %221 = vmatprep.subr.mxu0 0.0
      %222 = vmatpush1.msra.mxu0 %v191
      %223 = vmatprep.subr.mxu0 0.0
      %224 = vmatpush1.msra.mxu0 %v192
      %225 = vmatprep.subr.mxu0 0.0
      %226 = vmatpush1.msra.mxu0 %v193
      %227 = vmatprep.subr.mxu0 0.0
      %228 = vmatpush1.msra.mxu0 %v194
      %229 = vmatprep.subr.mxu0 0.0
      %230 = vmatpush1.msra.mxu0 %v195
      %231 = vmatprep.subr.mxu0 0.0
      %232 = vmatpush1.msra.mxu0 %v196
      %233 = vmatprep.subr.mxu0 0.0
      %234 = vmatpush1.msra.mxu0 %v197
      %235 = vmatprep.subr.mxu0 0.0
      %236 = vmatpush1.msra.mxu0 %v198
      %237 = vmatprep.subr.mxu0 0.0
      %238 = vmatpush1.msra.mxu0 %v199
      %239 = vmatprep.subr.mxu0 0.0
      %240 = vmatpush1.msra.mxu0 0.0
      %241 = vmatprep.subr.mxu0 0.0
      %242 = vmatpush1.msra.mxu0 0.0
      %243 = vmatprep.subr.mxu0 0.0
      %244 = vmatpush1.msra.mxu0 0.0
      %245 = vmatprep.subr.mxu0 0.0
      %246 = vmatpush1.msra.mxu0 0.0
      %247 = vmatprep.subr.mxu0 0.0
      %248 = vmatpush1.msra.mxu0 0.0
      %249 = vmatprep.subr.mxu0 0.0
      %250 = vmatpush1.msra.mxu0 0.0
      %251 = vmatprep.subr.mxu0 0.0
      %252 = vmatpush1.msra.mxu0 0.0
      %253 = vmatprep.subr.mxu0 0.0
      %254 = vmatpush1.msra.mxu0 0.0
      %255 = vmatprep.subr.mxu0 0.0
      %256 = vmatpush1.msra.mxu0 0.0
      %257 = vmatprep.subr.mxu0 0.0
      %258 = vmatpush1.msra.mxu0 0.0
      %259 = vmatprep.subr.mxu0 0.0
      %260 = vmatpush1.msra.mxu0 0.0
      %261 = vmatprep.subr.mxu0 0.0
      %262 = vmatpush1.msra.mxu0 0.0
      %263 = vmatprep.subr.mxu0 0.0
      %264 = vmatpush1.msra.mxu0 0.0
      %265 = vmatprep.subr.mxu0 0.0
      %266 = vmatpush1.msra.mxu0 0.0
      %267 = vmatprep.subr.mxu0 0.0
      %268 = vmatpush1.msra.mxu0 0.0
      %269 = vmatprep.subr.mxu0 0.0
      %270 = vmatpush1.msra.mxu0 0.0
      %271 = vmatprep.mubr.f32.mxu0 0.0
      %272 = vmatmul.mubr.f32.gmra.mrb[0].mxu0 %v183
      %v273 = vpop.f32.mrb[0].mxu0
      %v274 = vadd.f32 %v205, %v273
      %v275 = vpop.f32.mrb[0].mxu0
      %276 = vdwg.mxu0
      %277 = vmax.xlane.f32.xlu0 %v274
      %v278 = vpop.xlane.xlu0 %277
      %v279 = vsub.f32 %v274, %v278
      %v280 = vmul.f32 %v279, 1.442695
      %v281 = vpow.pop %v280
      %282 = vadd.xlane.f32.xlu0 %v281
      %v283 = vpop.xlane.xlu0 %282
      %v284 = vlog2.pop %v283
      %v285 = vmul.f32 %v284, 0.6931472
      %v286 = vsub.f32 %v279, %v285
      %287 = vst [vmem:[#allocation9] sm:$0xff] %v286
    $region41: #{tpu_custom_call.1} parent=1 // pred_fallthru
      _
    // Predicated region
    $region42: #{tpu_custom_call.1} parent=1 // pred_check
      _
    $region43: #{tpu_custom_call.1} parent=1 // pred_check_branch
      %289 = sbr.rel (0) target = $region45
    $region44: #{tpu_custom_call.1} parent=1 // pred_region
      %s291 = ssub.s32 128, 128
      %292 = vsyncadd [#allocation5], %s291
      %s294 = sshll.u32 [#allocation9], 4
      %s295 = int_to_ptr.vmem [resolvable:$true] %s294
      %297 = dma.vmem_to_hbm [thread:$0]  %s295, 128, %s5, [#allocation5]
    $region45: #{tpu_custom_call.1} parent=1 // pred_fallthru
      _
    // Predicated region
    $region46: #{tpu_custom_call.1} parent=1 // pred_check
      _
    $region47: #{tpu_custom_call.1} parent=1 // pred_check_branch
      %299 = sbr.rel (0) target = $region49
    $region48: #{tpu_custom_call.1} parent=1 // pred_region
      %300 = dma.done [#allocation5], 128
    $region49: #{tpu_custom_call.1} parent=1 // pred_fallthru
      _
    %301 = vsyncpa [#allocation4], 1
    %302 = vsyncpa [#allocation7], 1
    %303 = vsyncpa [#allocation5], 1

</llo_original>
